<compile_context>
chip_gen: v6e
topology: v6e:2x2x1
jax: 0.10.0
libtpu: 0.0.40
codegen_flags: <defaults>
</compile_context>

<pallas_src>
import functools

import jax
import jax.numpy as jnp
from jax.experimental import pallas as pl
from jax.experimental.pallas import tpu as pltpu


def _round_up(x, m):
    return ((x + m - 1) // m) * m


def _sublane_granularity(itemsize):
    # f32 packs 8 rows per vreg; bf16/fp16 pack 16; int8/fp8 pack 32.
    if itemsize >= 4:
        return 8
    if itemsize == 2:
        return 16
    return 32


def _vmem_budgets():
    """(tile working-set budget, vmem_limit cap) based on the chip's VMEM."""
    try:
        cap = pltpu.get_tpu_info().vmem_capacity_bytes
    except Exception:
        cap = 64 << 20  # be conservative if the query is unavailable
    if cap >= (100 << 20):          # v5e / v6e: 128 MiB physical
        return 64 << 20, 96 << 20
    return 24 << 20, 48 << 20       # v7x: 64 MiB per TensorCore


def _pick_tile_rows(rows, d, itemsize, budget_bytes):
    """Largest sublane-aligned row tile (capped at 2048) whose double-buffered
    in/out tiles plus f32 temporaries fit the budget, while guaranteeing at
    least 2 grid steps so v7x's two TensorCores both get rows."""
    d_lanes = _round_up(d, 128)                 # VMEM lane layout rounds up
    per_row = d_lanes * (4 * itemsize + 24)     # 2x in + 2x out bufs + f32 temps
    gran = _sublane_granularity(itemsize)

    t = max(1, budget_bytes // per_row)
    t = min(t, 2048)
    t = max(gran, (t // gran) * gran)

    # Megacore: prefer >= 2 grid steps (no-op when rows fit in one vreg pack).
    half = _round_up(max(pl.cdiv(rows, 2), 1), gran)
    t = min(t, max(half, gran))
    return t


def _layernorm_kernel(*refs, eps, d, use_bias):
    if use_bias:
        x_ref, w_ref, b_ref, o_ref = refs
    else:
        x_ref, w_ref, o_ref = refs
        b_ref = None

    x = x_ref[...].astype(jnp.float32)            # (tile_rows, d)

    # Trace-time constants: no in-kernel divides, only multiplies (VPU).
    inv_d = jnp.float32(1.0 / d)
    inv_dm1 = jnp.float32(1.0 / max(d - 1, 1))

    mean = jnp.sum(x, axis=-1, keepdims=True) * inv_d
    diff = x - mean
    # ddof=1 (unbiased) matches torch.Tensor.var() used by the module.
    var = jnp.sum(diff * diff, axis=-1, keepdims=True) * inv_dm1
    inv_std = jax.lax.rsqrt(var + jnp.float32(eps))   # EUP slot (effectively free)

    y = diff * inv_std * w_ref[...].astype(jnp.float32)
    if use_bias:
        y = y + b_ref[...].astype(jnp.float32)
    o_ref[...] = y.astype(o_ref.dtype)


def layernorm_pallas(x, weight, bias=None, *, eps=1e-5, use_bias=True,
                     tile_rows=None):
    """nanoGPT LayerNorm forward. x: (..., D); weight/bias: (D,)."""
    orig_shape = x.shape
    d = orig_shape[-1]
    x2 = x.reshape(-1, d)
    rows = x2.shape[0]
    itemsize = jnp.dtype(x.dtype).itemsize

    budget_bytes, limit_cap = _vmem_budgets()
    if tile_rows is None:
        tile_rows = _pick_tile_rows(rows, d, itemsize, budget_bytes)
    else:
        gran = _sublane_granularity(itemsize)
        tile_rows = max(gran, (int(tile_rows) // gran) * gran)

    grid = pl.cdiv(rows, tile_rows)   # Pallas masks the partial last row block.

    w2 = weight.reshape(1, d)
    inputs = [x2, w2]
    in_specs = [
        pl.BlockSpec((tile_rows, d), lambda i: (i, 0)),
        pl.BlockSpec((1, d), lambda i: (0, 0)),   # weight DMA'd once (constant map)
    ]
    if use_bias:
        assert bias is not None, "use_bias=True requires a bias array"
        b2 = bias.reshape(1, d)
        inputs.append(b2)
        in_specs.append(pl.BlockSpec((1, d), lambda i: (0, 0)))

    # VMEM: double-buffered input + output tiles, f32 temps, weight/bias rows.
    d_lanes = _round_up(d, 128)
    tile_bytes = tile_rows * d_lanes * (4 * itemsize + 24)
    wb_bytes = (2 if use_bias else 1) * 2 * d_lanes * 4
    vmem_limit_bytes = int(min(limit_cap,
                               max(tile_bytes + wb_bytes + (8 << 20), 16 << 20)))

    cost = pl.CostEstimate(
        flops=8 * rows * d,
        transcendentals=rows,
        bytes_accessed=2 * rows * d * itemsize
        + (2 if use_bias else 1) * d * jnp.dtype(weight.dtype).itemsize,
    )

    kernel = functools.partial(_layernorm_kernel, eps=float(eps), d=d,
                               use_bias=use_bias)

    out = pl.pallas_call(
        kernel,
        out_shape=jax.ShapeDtypeStruct((rows, d), x.dtype),
        grid_spec=pltpu.PrefetchScalarGridSpec(
            num_scalar_prefetch=0,
            grid=(grid,),
            in_specs=in_specs,
            out_specs=pl.BlockSpec((tile_rows, d), lambda i: (i, 0)),
        ),
        compiler_params=pltpu.CompilerParams(
            dimension_semantics=("parallel",),   # v7x: shard rows over both TCs
            vmem_limit_bytes=vmem_limit_bytes,
        ),
        cost_estimate=cost,
    )(*inputs)

    return out.reshape(orig_shape)


def layernorm_ref(x, weight, bias, *, eps=1e-5, use_bias=True):
    xf = x.astype(jnp.float32)
    mean = jnp.mean(xf, axis=-1, keepdims=True)
    var = jnp.var(xf, axis=-1, keepdims=True, ddof=1)  # torch.var default (unbiased)
    x_norm = (xf - mean) / jnp.sqrt(var + eps)
    wf = weight.astype(jnp.float32)
    y = wf * x_norm + bias.astype(jnp.float32) if use_bias else wf * x_norm
    return y.astype(x.dtype)


if __name__ == "__main__":
    eps = 1e-5
    key = jax.random.PRNGKey(0)

    # Small shapes consistent with the module (B, T, n_embd).  D=160 mirrors the
    # real n_embd=1600's "not a multiple of 128" property (masked-lane stats /
    # masked vst path); D=128 exercises the aligned path; T=7 exercises the
    # partial last row block; the bias=False case drops the bias DMA; the bf16
    # case exercises the low-precision store path.
    cases = [
        (2, 8, 160, True, jnp.float32, 1e-4),
        (2, 8, 128, True, jnp.float32, 1e-4),
        (2, 8, 128, False, jnp.float32, 1e-4),
        (2, 7, 160, True, jnp.float32, 1e-4),
        (2, 8, 128, True, jnp.bfloat16, 5e-2),
    ]
    for (B, T, D, use_bias, dtype, atol) in cases:
        key, kx, kw, kb = jax.random.split(key, 4)
        x = jax.random.normal(kx, (B, T, D), dtype=jnp.float32).astype(dtype)
        # Module init uses ones/zeros; perturb so the affine transform is exercised.
        weight = (jnp.ones((D,), jnp.float32)
                  + 0.1 * jax.random.normal(kw, (D,), jnp.float32)).astype(dtype)
        bias = (0.1 * jax.random.normal(kb, (D,), jnp.float32)).astype(dtype)

        y = layernorm_pallas(x, weight, bias if use_bias else None,
                             eps=eps, use_bias=use_bias)
        y = jax.block_until_ready(y)

        y_ref = layernorm_ref(x, weight, bias, eps=eps, use_bias=use_bias)
        assert jnp.allclose(y.astype(jnp.float32), y_ref.astype(jnp.float32),
                            atol=atol, rtol=1e-5), \
            f"mismatch vs reference for case {(B, T, D, use_bias, dtype)}"

    print("KERNEL_OK")
</pallas_src>

<mosaic_0001>
module attributes {stable_mosaic.version = 11 : i64} {
  func.func @_layernorm_kernel(%arg0: i32, %arg1: memref<8x160xf32, #tpu.memory_space<vmem>>, %arg2: memref<1x160xf32, #tpu.memory_space<vmem>>, %arg3: memref<1x160xf32, #tpu.memory_space<vmem>>, %arg4: memref<8x160xf32, #tpu.memory_space<vmem>>) attributes {dimension_semantics = [#tpu.dimension_semantics<parallel>], iteration_bounds = array<i64: 2>, scalar_prefetch = 0 : i64, scratch_operands = 0 : i64, tpu.core_type = #tpu.core_type<tc>, window_params = [{transform_indices = @transform_0, window_bounds = array<i64: 8, 160>}, {pipeline_mode = #tpu.pipeline_mode<synchronous>, transform_indices = @transform_1, window_bounds = array<i64: 1, 160>}, {pipeline_mode = #tpu.pipeline_mode<synchronous>, transform_indices = @transform_2, window_bounds = array<i64: 1, 160>}, {transform_indices = @transform_3, window_bounds = array<i64: 8, 160>}]} {
    %c0 = arith.constant 0 : index
    %c0_0 = arith.constant 0 : index
    %0 = vector.load %arg1[%c0, %c0_0] : memref<8x160xf32, #tpu.memory_space<vmem>>, vector<8x160xf32>
    %cst = arith.constant dense<0.000000e+00> : vector<8xf32>
    %1 = vector.multi_reduction <add>, %0, %cst [1] : vector<8x160xf32> to vector<8xf32>
    %2 = vector.shape_cast %1 : vector<8xf32> to vector<8x1xf32>
    %cst_1 = arith.constant 6.250000e-03 : f32
    %3 = vector.broadcast %cst_1 : f32 to vector<8x1xf32>
    %4 = arith.mulf %2, %3 : vector<8x1xf32>
    %5 = vector.broadcast %4 : vector<8x1xf32> to vector<8x160xf32>
    %6 = arith.subf %0, %5 : vector<8x160xf32>
    %7 = arith.mulf %6, %6 : vector<8x160xf32>
    %cst_2 = arith.constant dense<0.000000e+00> : vector<8xf32>
    %8 = vector.multi_reduction <add>, %7, %cst_2 [1] : vector<8x160xf32> to vector<8xf32>
    %9 = vector.shape_cast %8 : vector<8xf32> to vector<8x1xf32>
    %cst_3 = arith.constant 0.00628930796 : f32
    %10 = vector.broadcast %cst_3 : f32 to vector<8x1xf32>
    %11 = arith.mulf %9, %10 : vector<8x1xf32>
    %cst_4 = arith.constant 9.99999974E-6 : f32
    %12 = vector.broadcast %cst_4 : f32 to vector<8x1xf32>
    %13 = arith.addf %11, %12 : vector<8x1xf32>
    %14 = math.rsqrt %13 : vector<8x1xf32>
    %15 = vector.broadcast %14 : vector<8x1xf32> to vector<8x160xf32>
    %16 = arith.mulf %6, %15 : vector<8x160xf32>
    %c0_5 = arith.constant 0 : index
    %c0_6 = arith.constant 0 : index
    %17 = vector.load %arg2[%c0_5, %c0_6] : memref<1x160xf32, #tpu.memory_space<vmem>>, vector<1x160xf32>
    %18 = vector.broadcast %17 : vector<1x160xf32> to vector<8x160xf32>
    %19 = arith.mulf %16, %18 : vector<8x160xf32>
    %c0_7 = arith.constant 0 : index
    %c0_8 = arith.constant 0 : index
    %20 = vector.load %arg3[%c0_7, %c0_8] : memref<1x160xf32, #tpu.memory_space<vmem>>, vector<1x160xf32>
    %21 = vector.broadcast %20 : vector<1x160xf32> to vector<8x160xf32>
    %22 = arith.addf %19, %21 : vector<8x160xf32>
    %c0_9 = arith.constant 0 : index
    %c0_10 = arith.constant 0 : index
    %23 = vector.load %arg4[%c0_9, %c0_10] : memref<8x160xf32, #tpu.memory_space<vmem>>, vector<8x160xf32>
    tpu.vector_store %arg4[%c0_9, %c0_10], %22 {strides = array<i32>} : memref<8x160xf32, #tpu.memory_space<vmem>>, vector<8x160xf32>,
    return
  }
  func.func @transform_0(%arg0: i32) -> (i32, i32) {
    %c0_i32 = arith.constant 0 : i32
    %c0_i32_0 = arith.constant 0 : i32
    return %arg0, %c0_i32 : i32, i32
  }
  func.func @transform_1(%arg0: i32) -> (i32, i32) {
    %c0_i32 = arith.constant 0 : i32
    %c0_i32_0 = arith.constant 0 : i32
    %c0_i32_1 = arith.constant 0 : i32
    return %c0_i32, %c0_i32_0 : i32, i32
  }
  func.func @transform_2(%arg0: i32) -> (i32, i32) {
    %c0_i32 = arith.constant 0 : i32
    %c0_i32_0 = arith.constant 0 : i32
    %c0_i32_1 = arith.constant 0 : i32
    return %c0_i32, %c0_i32_0 : i32, i32
  }
  func.func @transform_3(%arg0: i32) -> (i32, i32) {
    %c0_i32 = arith.constant 0 : i32
    %c0_i32_0 = arith.constant 0 : i32
    return %arg0, %c0_i32 : i32, i32
  }
}

</mosaic_0001>

<llo_original>
// kernel: tpu_custom_call.1
$region0: #{tpu_custom_call.1}
  #allocation0 [shape = 'u32[]', space=smem, size = 0x4, offset = 0x4, fixed_abs, tag = 'smem constant byte address 0x4 - core index']
  #allocation1 [shape = 'u32[144,128]{1,0:T(1,128)}', space=vmem, size = 0x12000, scoped, tag = 'internal scratch']
  %s0 = inlined_call_operand.hbm [shape: f32[16,160], index: 0, kind: input, shape index: {}]
  %s1 = inlined_call_operand.hbm [shape: f32[1,160], index: 1, kind: input, shape index: {}]
  %s2 = inlined_call_operand.vmem [shape: f32[1,160], index: 2, kind: input, shape index: {}]
  %s3 = inlined_call_operand.hbm [shape: f32[16,160], index: 3, kind: output, shape index: {}]
  %s4 = sld [smem:[#allocation0]]
  $region53: #{tpu_custom_call.1} parent=0
    _
  %s6 = ssub.s32 1, %s4
  %s7 = scalar_select 0, %s6, %s4
  $region1: #{tpu_custom_call.1} parent=0
    #allocation2 [shape = 'u8[16384]{0}', space=vmem, size = 0x4000, scoped, tag = 'input window, operand 0']
    #allocation3 [shape = 's32[2]{0}', space=sflag, size = 0x8, scoped, tag = 'scoped memory for tpu_custom_call.1']
    #allocation4 [shape = 's32[2]{0}', space=sflag, size = 0x8, scoped, tag = 'scoped memory for tpu_custom_call.1']
    #allocation5 [shape = 'u8[1024]{0}', space=vmem, size = 0x400, scoped, tag = 'input window, operand 1, single buffered']
    #allocation6 [shape = 's32[1]{0}', space=sflag, size = 0x4, scoped, tag = 'scoped memory for tpu_custom_call.1']
    #allocation7 [shape = 'u8[16384]{0}', space=vmem, size = 0x4000, scoped, tag = 'output window, operand 0']
    %8 = vsyncpa [#allocation3], 0
    %s9 = scalar_lea.sflag [#allocation3], 1
    %10 = vsyncpa %s9, 0
    %11 = vsyncpa [#allocation6], 0
    %12 = vsyncpa [#allocation4], 0
    %s13 = scalar_lea.sflag [#allocation4], 1
    %14 = vsyncpa %s13, 0
    loop: start=0, step=1, limit=4
    $region2: #{tpu_custom_call.1} parent=1 // loop_pre_header
      _
    $region3: #{tpu_custom_call.1} parent=1 // loop_header
      %s16 = sphi 0, %s20
      %p17 = scmp.ge.s32.totalorder %s16, 4
      %s26 = sphi 0, %s28
      %s29 = sphi 0, %s26
      %s30 = sphi 0, %s29
      %s46 = sphi 0, %s30
      %s50 = sphi 0, %s50
      %s52 = sphi 0, %s50
      %s53 = sphi 0, %s52
      %s67 = sphi 0, %s53
      %s71 = sphi 0, %s71
      %s73 = sphi 0, %s71
      %s74 = sphi 0, %s73
      %s88 = sphi 0, %s74
      %s94 = sphi 0, %s96
      %s97 = sphi 0, %s94
      %s98 = sphi 0, %s97
      %s114 = sphi 0, %s98
    $region4: #{tpu_custom_call.1} parent=1 // loop_header_branch
      %19 = sbr.rel (%p17) target = $region8
    $region5: #{tpu_custom_call.1} parent=1 // loop_body
      %s21 = ssub.s32 %s16, 1
      %s22 = ssub.s32 %s16, 2
      %s23 = sadd.s32 %s16, 1
      %s24 = ssub.s32 %s16, %s23
      %p25 = scmp.eq.s32.totalorder %s24, 0
      %s27 = sadd.s32 %s26, 1
      %s28 = scalar_select %p25, %s26, %s27
      %p31 = pneg %p25
      %p32 = scmp.eq.s32.totalorder %s16, 1
      %p33 = por %p31, %p32
      %p34 = scmp.ne.s32.totalorder %s26, %s29
      %p35 = scmp.eq.s32.totalorder %s16, 0
      %p36 = por %p34, %p35
      %p37 = scmp.ne.s32.totalorder %s26, %s29
      %p38 = scmp.eq.s32.totalorder %s21, 1
      %p39 = por %p37, %p38
      %p40 = scmp.ne.s32.totalorder %s29, %s30
      %p41 = scmp.eq.s32.totalorder %s21, 0
      %p42 = por %p40, %p41
      %p43 = scmp.ne.s32.totalorder %s29, %s30
      %p44 = scmp.eq.s32.totalorder %s22, 1
      %p45 = por %p43, %p44
      %p47 = scmp.ne.s32.totalorder %s30, %s46
      %p48 = scmp.eq.s32.totalorder %s22, 0
      %p49 = por %p47, %p48
      %s51 = sadd.s32 %s50, 1
      %p54 = scmp.eq.s32.totalorder %s16, 1
      %p55 = scmp.ne.s32.totalorder %s50, %s52
      %p56 = scmp.eq.s32.totalorder %s16, 0
      %p57 = por %p55, %p56
      %p58 = scmp.ne.s32.totalorder %s50, %s52
      %p59 = scmp.eq.s32.totalorder %s21, 1
      %p60 = por %p58, %p59
      %p61 = scmp.ne.s32.totalorder %s52, %s53
      %p62 = scmp.eq.s32.totalorder %s21, 0
      %p63 = por %p61, %p62
      %p64 = scmp.ne.s32.totalorder %s52, %s53
      %p65 = scmp.eq.s32.totalorder %s22, 1
      %p66 = por %p64, %p65
      %p68 = scmp.ne.s32.totalorder %s53, %s67
      %p69 = scmp.eq.s32.totalorder %s22, 0
      %p70 = por %p68, %p69
      %s72 = sadd.s32 %s71, 1
      %p75 = scmp.eq.s32.totalorder %s16, 1
      %p76 = scmp.ne.s32.totalorder %s71, %s73
      %p77 = scmp.eq.s32.totalorder %s16, 0
      %p78 = por %p76, %p77
      %p79 = scmp.ne.s32.totalorder %s71, %s73
      %p80 = scmp.eq.s32.totalorder %s21, 1
      %p81 = por %p79, %p80
      %p82 = scmp.ne.s32.totalorder %s73, %s74
      %p83 = scmp.eq.s32.totalorder %s21, 0
      %p84 = por %p82, %p83
      %p85 = scmp.ne.s32.totalorder %s73, %s74
      %p86 = scmp.eq.s32.totalorder %s22, 1
      %p87 = por %p85, %p86
      %p89 = scmp.ne.s32.totalorder %s74, %s88
      %p90 = scmp.eq.s32.totalorder %s22, 0
      %p91 = por %p89, %p90
      %s92 = ssub.s32 %s16, %s23
      %p93 = scmp.eq.s32.totalorder %s92, 0
      %s95 = sadd.s32 %s94, 1
      %s96 = scalar_select %p93, %s94, %s95
      %p99 = pneg %p93
      %p100 = scmp.eq.s32.totalorder %s16, 1
      %p101 = por %p99, %p100
      %p102 = scmp.ne.s32.totalorder %s94, %s97
      %p103 = scmp.eq.s32.totalorder %s16, 0
      %p104 = por %p102, %p103
      %p105 = scmp.ne.s32.totalorder %s94, %s97
      %p106 = scmp.eq.s32.totalorder %s21, 1
      %p107 = por %p105, %p106
      %p108 = scmp.ne.s32.totalorder %s97, %s98
      %p109 = scmp.eq.s32.totalorder %s21, 0
      %p110 = por %p108, %p109
      %p111 = scmp.ne.s32.totalorder %s97, %s98
      %p112 = scmp.eq.s32.totalorder %s22, 1
      %p113 = por %p111, %p112
      %p115 = scmp.ne.s32.totalorder %s98, %s114
      %p116 = scmp.eq.s32.totalorder %s22, 0
      %p117 = por %p115, %p116
      %p118 = scmp.le.s32.totalorder 1, %s16
      %p119 = scmp.lt.s32.totalorder %s16, 3
      %p120 = pnand %p118, %p119
      %p121 = pneg %p120
      // Predicated region
      $region9: #{tpu_custom_call.1} parent=5 // pred_check
        _
      $region10: #{tpu_custom_call.1} parent=5 // pred_check_branch
        %123 = sbr.rel (%p120) target = $region12
      $region11: #{tpu_custom_call.1} parent=5 // pred_region
        %s124 = ssub.s32 %s16, 1
        // Predicated region
        $region13: #{tpu_custom_call.1} parent=11 // pred_check
          %p125 = pneg %p63
        $region14: #{tpu_custom_call.1} parent=11 // pred_check_branch
          %127 = sbr.rel (%p125) target = $region16
        $region15: #{tpu_custom_call.1} parent=11 // pred_region
          %s129 = ssub.s32 32, 32
          %130 = vsyncadd [#allocation6], %s129
          %s132 = sshll.u32 [#allocation5], 4
          %s133 = int_to_ptr.vmem [resolvable:$true] %s132
          %135 = dma.hbm_to_vmem [thread:$0]  %s1, 32, %s133, [#allocation6]
        $region16: #{tpu_custom_call.1} parent=11 // pred_fallthru
          _
        // Predicated region
        $region17: #{tpu_custom_call.1} parent=11 // pred_check
          %p136 = pneg %p84
        $region18: #{tpu_custom_call.1} parent=11 // pred_check_branch
          %138 = sbr.rel (%p136) target = $region20
        $region19: #{tpu_custom_call.1} parent=11 // pred_region
          _
        $region20: #{tpu_custom_call.1} parent=11 // pred_fallthru
          _
      $region12: #{tpu_custom_call.1} parent=5 // pred_fallthru
        _
      %p139 = scmp.lt.s32.totalorder %s16, 2
      // Predicated region
      $region21: #{tpu_custom_call.1} parent=5 // pred_check
        %p140 = pneg %p139
      $region22: #{tpu_custom_call.1} parent=5 // pred_check_branch
        %142 = sbr.rel (%p140) target = $region24
      $region23: #{tpu_custom_call.1} parent=5 // pred_region
        // Predicated region
        $region25: #{tpu_custom_call.1} parent=23 // pred_check
          %p143 = pneg %p36
        $region26: #{tpu_custom_call.1} parent=23 // pred_check_branch
          %145 = sbr.rel (%p143) target = $region28
        $region27: #{tpu_custom_call.1} parent=23 // pred_region
          %s146 = sand.u32 %s26, 1
          %s147 = scalar_lea.sflag [#allocation3], %s146
          %s148 = sand.u32 %s26, 1
          %s149 = smul.addr %s148, 16
          %s150 = scalar_lea.vmem [#allocation2], %s149
          %s152 = ssub.s32 256, 256
          %153 = vsyncadd %s147, %s152
          %s154 = smul.addr %s16, 2
          %s155 = smul.addr %s154, 128
          %s156 = scalar_lea.hbm %s0, %s155
          %s158 = sshll.u32 %s150, 4
          %s159 = int_to_ptr.vmem [resolvable:$true] %s158
          %161 = dma.hbm_to_vmem [thread:$0]  %s156, 256, %s159, %s147
        $region28: #{tpu_custom_call.1} parent=23 // pred_fallthru
          _
      $region24: #{tpu_custom_call.1} parent=5 // pred_fallthru
        _
      %p162 = scmp.le.s32.totalorder 1, %s16
      %p163 = scmp.lt.s32.totalorder %s16, 3
      %p164 = pnand %p162, %p163
      %p165 = pneg %p164
      // Predicated region
      $region29: #{tpu_custom_call.1} parent=5 // pred_check
        _
      $region30: #{tpu_custom_call.1} parent=5 // pred_check_branch
        %167 = sbr.rel (%p164) target = $region32
      $region31: #{tpu_custom_call.1} parent=5 // pred_region
        %s168 = ssub.s32 %s16, 1
        %s169 = sand.u32 %s29, 1
        %s170 = scalar_lea.sflag [#allocation3], %s169
        %s171 = sand.u32 %s29, 1
        %s172 = smul.addr %s171, 16
        %s173 = scalar_lea.vmem [#allocation2], %s172
        // Predicated region
        $region33: #{tpu_custom_call.1} parent=31 // pred_check
          %p174 = pneg %p42
        $region34: #{tpu_custom_call.1} parent=31 // pred_check_branch
          %176 = sbr.rel (%p174) target = $region36
        $region35: #{tpu_custom_call.1} parent=31 // pred_region
          %177 = dma.done %s170, 256
        $region36: #{tpu_custom_call.1} parent=31 // pred_fallthru
          _
        // Predicated region
        $region37: #{tpu_custom_call.1} parent=31 // pred_check
          %p178 = pneg %p63
        $region38: #{tpu_custom_call.1} parent=31 // pred_check_branch
          %180 = sbr.rel (%p178) target = $region40
        $region39: #{tpu_custom_call.1} parent=31 // pred_region
          %181 = dma.done [#allocation6], 32
        $region40: #{tpu_custom_call.1} parent=31 // pred_fallthru
          _
        %s182 = sand.u32 %s29, 1
        %s183 = scalar_lea.sflag [#allocation3], %s182
        %s184 = sand.u32 %s29, 1
        %s185 = smul.addr %s184, 16
        %s186 = scalar_lea.vmem [#allocation2], %s185
        %p187 = pneg %p42
        %p188 = pneg %p39
        %p189 = pneg %p63
        %p190 = pneg %p60
        %p191 = pneg %p84
        %p192 = pneg %p81
        %p193 = pneg %p110
        %p194 = pneg %p107
        %s195 = sand.u32 %s97, 1
        %s196 = scalar_lea.sflag [#allocation4], %s195
        %s197 = sand.u32 %s97, 1
        %s198 = smul.addr %s197, 16
        %s199 = scalar_lea.vmem [#allocation7], %s198
        %v200 = vld [vmem:[%s173] sm:$0xff]
        %v201 = vld [vmem:[%s173 + $0x8] sm:$0xff]
        %vm202 = vcmask 261120
        %v203 = vsel %vm202, %v201, 0.0
        %v204 = vadd.f32 %v200, %v203
        %205 = vadd.xlane.f32.xlu0 %v204
        %v206 = vpop.xlane.xlu0 %205
        %v207 = vmul.f32 %v206, 0.00625
        %v208 = vsub.f32 %v200, %v207
        %v209 = vsub.f32 %v201, %v207
        %v210 = vmul.f32 %v208, %v208
        %v211 = vmul.f32 %v209, %v209
        %v212 = vsel %vm202, %v211, 0.0
        %v213 = vadd.f32 %v210, %v212
        %214 = vadd.xlane.f32.xlu0 %v213
        %v215 = vpop.xlane.xlu0 %214
        %v216 = vmul.f32 %v215, 0.006289308
        %v217 = vadd.f32 %v216, 1e-05
        %v218 = vrsqrt.pop %v217
        %v219 = vmul.f32 %v208, %v218
        %v220 = vmul.f32 %v209, %v218
        %v221 = vld [vmem:[#allocation5] sm:$0x3]
        %v223 = vlaneseq
        %v224 = vshrl.u32 %v223, 7
        %v225 = vsub.s32 0, %v224
        %v226 = vrot.slane %v221, %v225
        %v227 = vlaneseq
        %v228 = vshrl.u32 %v227, 7
        %v229 = vsub.s32 1, %v228
        %v230 = vrot.slane %v221, %v229
        %v233 = vmul.f32 %v219, %v226
        %v234 = vmul.f32 %v220, %v230
        %v235 = vld [vmem:[%s2] sm:$0x3]
        %v237 = vlaneseq
        %v238 = vshrl.u32 %v237, 7
        %v239 = vsub.s32 0, %v238
        %v240 = vrot.slane %v235, %v239
        %v241 = vlaneseq
        %v242 = vshrl.u32 %v241, 7
        %v243 = vsub.s32 1, %v242
        %v244 = vrot.slane %v235, %v243
        %v247 = vadd.f32 %v233, %v240
        %v248 = vadd.f32 %v234, %v244
        %249 = vst [vmem:[%s199] sm:$0xff] %v247
        %250 = vst.msk [vmem:[%s199 + $0x8] sm:$0xff] %vm202, %v248
        %s251 = sand.u32 %s97, 1
        %s252 = scalar_lea.sflag [#allocation4], %s251
        %s253 = sand.u32 %s97, 1
        %s254 = smul.addr %s253, 16
        %s255 = scalar_lea.vmem [#allocation7], %s254
        // Predicated region
        $region41: #{tpu_custom_call.1} parent=31 // pred_check
          %p256 = pneg %p107
        $region42: #{tpu_custom_call.1} parent=31 // pred_check_branch
          %258 = sbr.rel (%p256) target = $region44
        $region43: #{tpu_custom_call.1} parent=31 // pred_region
          %s260 = ssub.s32 256, 256
          %261 = vsyncadd %s252, %s260
          %s262 = smul.addr %s21, 2
          %s263 = smul.addr %s262, 128
          %s264 = scalar_lea.hbm %s3, %s263
          %s266 = sshll.u32 %s255, 4
          %s267 = int_to_ptr.vmem [resolvable:$true] %s266
          %269 = dma.vmem_to_hbm [thread:$0]  %s267, 256, %s264, %s252
        $region44: #{tpu_custom_call.1} parent=31 // pred_fallthru
          _
      $region32: #{tpu_custom_call.1} parent=5 // pred_fallthru
        _
      %p270 = scmp.le.s32.totalorder 2, %s16
      // Predicated region
      $region45: #{tpu_custom_call.1} parent=5 // pred_check
        %p271 = pneg %p270
      $region46: #{tpu_custom_call.1} parent=5 // pred_check_branch
        %273 = sbr.rel (%p271) target = $region48
      $region47: #{tpu_custom_call.1} parent=5 // pred_region
        %s274 = ssub.s32 %s16, 2
        // Predicated region
        $region49: #{tpu_custom_call.1} parent=47 // pred_check
          %p275 = pneg %p113
        $region50: #{tpu_custom_call.1} parent=47 // pred_check_branch
          %277 = sbr.rel (%p275) target = $region52
        $region51: #{tpu_custom_call.1} parent=47 // pred_region
          %s278 = sand.u32 %s98, 1
          %s279 = scalar_lea.sflag [#allocation4], %s278
          %s280 = sand.u32 %s98, 1
          %s281 = smul.addr %s280, 16
          %s282 = scalar_lea.vmem [#allocation7], %s281
          %283 = dma.done %s279, 256
        $region52: #{tpu_custom_call.1} parent=47 // pred_fallthru
          _
      $region48: #{tpu_custom_call.1} parent=5 // pred_fallthru
        _
    $region6: #{tpu_custom_call.1} parent=1 // loop_footer
      %s20 = sadd.s32 1, %s16
    $region7: #{tpu_custom_call.1} parent=1 // loop_footer_branch
      %15 = sbr.rel target = $region3
    $region8: #{tpu_custom_call.1} parent=1 // loop_exit
      _
    %284 = vsyncpa [#allocation3], 1
    %s285 = scalar_lea.sflag [#allocation3], 1
    %286 = vsyncpa %s285, 1
    %287 = vsyncpa [#allocation6], 1
    %288 = vsyncpa [#allocation4], 1
    %s289 = scalar_lea.sflag [#allocation4], 1
    %290 = vsyncpa %s289, 1

</llo_original>
